<compile_context>
chip_gen: v7x
topology: tpu7x:2x2x1
jax: 0.10.0
libtpu: 0.0.40
codegen_flags: <defaults>
</compile_context>

<pallas_src>
import functools

import jax
import jax.numpy as jnp
import numpy as np
from jax.experimental import pallas as pl
from jax.experimental.pallas import tpu as pltpu


# ----------------------------- kernels --------------------------------------


def _se_fused_kernel(x_ref, w1_ref, w2_ref, o_ref):
    # Squeeze: spatial sum with f32 accumulation (1/HW is pre-folded into w1,
    # so any zero-padded lanes never bias the mean).
    s = jnp.sum(x_ref[...], axis=-1, dtype=jnp.float32)                    # (Bt, C)
    # Excitation: Linear -> ReLU -> Linear -> Sigmoid (bias-free).
    h = jnp.maximum(
        jnp.dot(s, w1_ref[...], preferred_element_type=jnp.float32), 0.0)  # (Bt, Cr)
    y = jax.nn.sigmoid(
        jnp.dot(h, w2_ref[...], preferred_element_type=jnp.float32))       # (Bt, C)
    # Scale: re-stream x from the resident input buffer; multiply in native
    # dtype (halves vreg pressure for bf16 inputs).
    o_ref[...] = x_ref[...] * y.astype(o_ref.dtype)[:, :, None]


def _se_reduce_excite_kernel(x_ref, w1_ref, w2_ref, y_ref, acc_ref):
    # Fallback pass 1: spatially tiled squeeze, excitation at the last step.
    @pl.when(pl.program_id(1) == 0)
    def _():
        acc_ref[...] = jnp.zeros_like(acc_ref)

    acc_ref[...] += jnp.sum(x_ref[...], axis=-1, dtype=jnp.float32)        # (Bt, C)

    @pl.when(pl.program_id(1) == pl.num_programs(1) - 1)
    def _():
        h = jnp.maximum(
            jnp.dot(acc_ref[...], w1_ref[...],
                    preferred_element_type=jnp.float32), 0.0)
        y = jax.nn.sigmoid(
            jnp.dot(h, w2_ref[...], preferred_element_type=jnp.float32))
        y_ref[...] = y[None]                                               # (1, Bt, C)


def _se_scale_kernel(x_ref, y_ref, o_ref):
    # Fallback pass 2: out = x * y (broadcast over spatial), native dtype.
    y = y_ref[0]                                                           # (Bt, C) f32
    o_ref[...] = x_ref[...] * y.astype(o_ref.dtype)[:, :, None]


# ----------------------------- wrapper ---------------------------------------


def _round_up(v, m):
    return ((v + m - 1) // m) * m


def _vmem_capacity_bytes():
    try:
        info = pltpu.get_tpu_info()
        cap = getattr(info, "vmem_capacity_bytes", None)
        if cap:
            return int(cap)
    except Exception:
        pass
    return 64 * 1024 * 1024  # conservative default (v7x per-TC VMEM)


@functools.partial(jax.jit, static_argnames=("block_bytes_cap",))
def se_attention(x_nchw, w1, w2, block_bytes_cap=None):
    """x_nchw: (B, C, H, W); w1: (C, C//r); w2: (C//r, C).

    Weights are pre-transposed from PyTorch's (out, in) layout so the kernel
    computes y @ W.  `block_bytes_cap` is a static test hook to force the
    two-pass spatially-tiled fallback.
    """
    B, C, H, W = x_nchw.shape
    HW = H * W
    Cr = w1.shape[1]
    dtype = x_nchw.dtype
    itemsize = jnp.dtype(dtype).itemsize

    # ---- generation-aware budgets -------------------------------------------
    vmem_cap = _vmem_capacity_bytes()
    if vmem_cap <= 96 * 1024 * 1024:       # v7x: 64 MiB physical VMEM per TC
        vmem_limit = 32 * 1024 * 1024
        target_block = 4 * 1024 * 1024
        max_block = 7 * 1024 * 1024        # 2*(in)+2*(out) blocks < vmem_limit
    else:                                  # v5e / v6e: 128 MiB VMEM
        vmem_limit = 48 * 1024 * 1024
        target_block = 6 * 1024 * 1024
        max_block = 10 * 1024 * 1024
    if block_bytes_cap is not None:        # explicit override / test hook
        target_block = min(target_block, block_bytes_cap)
        max_block = min(max_block, block_bytes_cap)

    # Fold the true 1/HW mean normalization into w1 (linear-equivalent; spatial
    # zero padding then never biases the mean, and the per-element mul is gone).
    w1_scaled = w1.astype(jnp.float32) * (1.0 / HW)
    w2_f32 = w2.astype(jnp.float32)

    x_flat = x_nchw.reshape(B, C, HW)

    # VMEM footprint of one batch element's (C, HW) slab (lane/sublane padded).
    lanes = _round_up(HW, 128)
    subl = _round_up(C, 8)
    per_b_bytes = subl * lanes * itemsize

    if per_b_bytes <= max_block:
        # ---------------- fused single-pass path ------------------------------
        # Spatial layout: pass unpadded with a full-extent last block dim unless
        # HW is tiny and misaligned (one-off pad keeps lanes dense there).
        if HW % 128 == 0 or HW >= 256:
            HWp = HW
            x_in = x_flat
            pad_sp = False
        else:
            HWp = _round_up(HW, 128)
            x_in = jnp.pad(x_flat, ((0, 0), (0, 0), (0, HWp - HW)))
            pad_sp = True

        # Batch block: largest divisor of B under the byte target (no batch
        # padding), keeping the 'parallel' grid >= 2 steps for v7x megacore and
        # preferring an even step count.
        bt_cap = max(1, target_block // per_b_bytes)
        divs = [d for d in range(1, B + 1) if B % d == 0]
        cands = [d for d in divs if d <= bt_cap and (B < 2 or B // d >= 2)]
        if not cands:
            cands = [1]
        even = [d for d in cands if (B // d) % 2 == 0]
        Bt = max(even) if even else max(cands)

        cost = pl.CostEstimate(
            flops=int(3 * B * C * HW + 4 * B * C * Cr),
            transcendentals=int(B * C),
            bytes_accessed=int(2 * B * C * HWp * itemsize + 8 * C * Cr),
        )

        out_flat = pl.pallas_call(
            _se_fused_kernel,
            out_shape=jax.ShapeDtypeStruct((B, C, HWp), dtype),
            grid_spec=pltpu.PrefetchScalarGridSpec(
                num_scalar_prefetch=0,
                grid=(B // Bt,),
                in_specs=[
                    pl.BlockSpec((Bt, C, HWp), lambda b: (b, 0, 0)),
                    pl.BlockSpec((C, Cr), lambda b: (0, 0)),
                    pl.BlockSpec((Cr, C), lambda b: (0, 0)),
                ],
                out_specs=pl.BlockSpec((Bt, C, HWp), lambda b: (b, 0, 0)),
            ),
            compiler_params=pltpu.CompilerParams(
                dimension_semantics=("parallel",),
                vmem_limit_bytes=vmem_limit,
            ),
            cost_estimate=cost,
        )(x_in, w1_scaled, w2_f32)

        if pad_sp:
            out_flat = out_flat[:, :, :HW]
        return out_flat.reshape(B, C, H, W)

    # ---------------- two-pass fallback (huge C*HW per batch element) --------
    # Pass 1: spatially tiled squeeze + excitation -> y (B, 1, C) in f32.
    # Pass 2: spatially tiled scale -> out = x * y.
    Bt = 1
    HWt = max(128, (target_block // max(subl * itemsize, 1)) // 128 * 128)
    HWt = min(HWt, _round_up(HW, 128))
    HWp = _round_up(HW, HWt)
    x_in = x_flat if HWp == HW else jnp.pad(
        x_flat, ((0, 0), (0, 0), (0, HWp - HW)))
    n_sp = HWp // HWt

    y = pl.pallas_call(
        _se_reduce_excite_kernel,
        out_shape=jax.ShapeDtypeStruct((B // Bt, Bt, C), jnp.float32),
        grid_spec=pltpu.PrefetchScalarGridSpec(
            num_scalar_prefetch=0,
            grid=(B // Bt, n_sp),
            in_specs=[
                pl.BlockSpec((Bt, C, HWt), lambda b, s: (b, 0, s)),
                pl.BlockSpec((C, Cr), lambda b, s: (0, 0)),
                pl.BlockSpec((Cr, C), lambda b, s: (0, 0)),
            ],
            out_specs=pl.BlockSpec((1, Bt, C), lambda b, s: (b, 0, 0)),
            scratch_shapes=[pltpu.VMEM((Bt, C), jnp.float32)],
        ),
        compiler_params=pltpu.CompilerParams(
            dimension_semantics=("parallel", "arbitrary"),
            vmem_limit_bytes=vmem_limit,
        ),
    )(x_in, w1_scaled, w2_f32)

    out_flat = pl.pallas_call(
        _se_scale_kernel,
        out_shape=jax.ShapeDtypeStruct((B, C, HWp), dtype),
        grid_spec=pltpu.PrefetchScalarGridSpec(
            num_scalar_prefetch=0,
            grid=(B // Bt, n_sp),
            in_specs=[
                pl.BlockSpec((Bt, C, HWt), lambda b, s: (b, 0, s)),
                pl.BlockSpec((1, Bt, C), lambda b, s: (b, 0, 0)),
            ],
            out_specs=pl.BlockSpec((Bt, C, HWt), lambda b, s: (b, 0, s)),
        ),
        compiler_params=pltpu.CompilerParams(
            dimension_semantics=("parallel", "parallel"),
            vmem_limit_bytes=vmem_limit,
        ),
    )(x_in, y)

    if HWp != HW:
        out_flat = out_flat[:, :, :HW]
    return out_flat.reshape(B, C, H, W)


# ----------------------------- reference & test ------------------------------


def se_attention_ref(x_nchw, w1, w2):
    # Pure-JAX reference of the PyTorch forward (eval mode, empty history).
    y = jnp.mean(x_nchw.astype(jnp.float32), axis=(2, 3))           # (B, C)
    y = jnp.maximum(y @ w1.astype(jnp.float32), 0.0)                # (B, C//r)
    y = jax.nn.sigmoid(y @ w2.astype(jnp.float32))                  # (B, C)
    return x_nchw * y[:, :, None, None].astype(x_nchw.dtype)


if __name__ == "__main__":
    # Small shapes consistent with the module (channel divisible by reduction).
    B, C, H, W = 2, 128, 16, 16
    reduction = 16
    Cr = C // reduction

    key = jax.random.PRNGKey(0)
    kx, k1, k2 = jax.random.split(key, 3)
    x = jax.random.normal(kx, (B, C, H, W), dtype=jnp.float32)
    # Deterministic synthetic weights (Linear, bias=False).  PyTorch Linear
    # stores (out, in); pre-transposed here to (in, out) for y @ W.
    w1 = jax.random.normal(k1, (C, Cr), dtype=jnp.float32) * 0.05    # fc[0].weight.T
    w2 = jax.random.normal(k2, (Cr, C), dtype=jnp.float32) * 0.05    # fc[2].weight.T

    ref = se_attention_ref(x, w1, w2)

    # Fused single-pass path.
    out = jax.block_until_ready(se_attention(x, w1, w2, block_bytes_cap=None))
    np.testing.assert_allclose(np.asarray(out), np.asarray(ref),
                               rtol=1e-5, atol=1e-5)

    # Force the two-pass spatially-tiled fallback to verify the guard path.
    out_fb = jax.block_until_ready(
        se_attention(x, w1, w2, block_bytes_cap=64 * 1024))
    np.testing.assert_allclose(np.asarray(out_fb), np.asarray(ref),
                               rtol=1e-5, atol=1e-5)

    print("KERNEL_OK")
</pallas_src>

<mosaic_0001>
module attributes {stable_mosaic.version = 11 : i64} {
  func.func @_se_fused_kernel(%arg0: i32, %arg1: memref<1x128x256xf32, #tpu.memory_space<vmem>>, %arg2: memref<128x8xf32, #tpu.memory_space<vmem>>, %arg3: memref<8x128xf32, #tpu.memory_space<vmem>>, %arg4: memref<1x128x256xf32, #tpu.memory_space<vmem>>) attributes {dimension_semantics = [#tpu.dimension_semantics<parallel>], iteration_bounds = array<i64: 2>, scalar_prefetch = 0 : i64, scratch_operands = 0 : i64, tpu.core_type = #tpu.core_type<tc>, window_params = [{transform_indices = @transform_0, window_bounds = array<i64: 1, 128, 256>}, {pipeline_mode = #tpu.pipeline_mode<synchronous>, transform_indices = @transform_1, window_bounds = array<i64: 128, 8>}, {pipeline_mode = #tpu.pipeline_mode<synchronous>, transform_indices = @transform_2, window_bounds = array<i64: 8, 128>}, {transform_indices = @transform_3, window_bounds = array<i64: 1, 128, 256>}]} {
    %c0 = arith.constant 0 : index
    %c0_0 = arith.constant 0 : index
    %c0_1 = arith.constant 0 : index
    %0 = vector.load %arg1[%c0, %c0_0, %c0_1] : memref<1x128x256xf32, #tpu.memory_space<vmem>>, vector<1x128x256xf32>
    %cst = arith.constant dense<0.000000e+00> : vector<1x128xf32>
    %1 = vector.multi_reduction <add>, %0, %cst [2] : vector<1x128x256xf32> to vector<1x128xf32>
    %c0_2 = arith.constant 0 : index
    %c0_3 = arith.constant 0 : index
    %2 = vector.load %arg2[%c0_2, %c0_3] : memref<128x8xf32, #tpu.memory_space<vmem>>, vector<128x8xf32>
    %cst_4 = arith.constant dense<0.000000e+00> : vector<1x8xf32>
    %3 = tpu.matmul %1, %2, %cst_4 {dimension_numbers = #tpu.dot_dimension_numbers<[1], [0], [0], [1], [0, 0, 1, 1], [], []>} : vector<1x128xf32>, vector<128x8xf32>, vector<1x8xf32> -> vector<1x8xf32>
    %cst_5 = arith.constant 0.000000e+00 : f32
    %4 = vector.broadcast %cst_5 : f32 to vector<1x8xf32>
    %5 = arith.maximumf %3, %4 : vector<1x8xf32>
    %c0_6 = arith.constant 0 : index
    %c0_7 = arith.constant 0 : index
    %6 = vector.load %arg3[%c0_6, %c0_7] : memref<8x128xf32, #tpu.memory_space<vmem>>, vector<8x128xf32>
    %cst_8 = arith.constant dense<0.000000e+00> : vector<1x128xf32>
    %7 = tpu.matmul %5, %6, %cst_8 {dimension_numbers = #tpu.dot_dimension_numbers<[1], [0], [0], [1], [0, 0, 1, 1], [], []>} : vector<1x8xf32>, vector<8x128xf32>, vector<1x128xf32> -> vector<1x128xf32>
    %8 = arith.negf %7 : vector<1x128xf32>
    %9 = math.exp %8 : vector<1x128xf32>
    %cst_9 = arith.constant 1.000000e+00 : f32
    %10 = vector.broadcast %cst_9 : f32 to vector<1x128xf32>
    %11 = arith.addf %10, %9 : vector<1x128xf32>
    %12 = arith.divf %10, %11 : vector<1x128xf32>
    %c0_10 = arith.constant 0 : index
    %c0_11 = arith.constant 0 : index
    %c0_12 = arith.constant 0 : index
    %13 = vector.load %arg1[%c0_10, %c0_11, %c0_12] : memref<1x128x256xf32, #tpu.memory_space<vmem>>, vector<1x128x256xf32>
    %14 = vector.shape_cast %12 : vector<1x128xf32> to vector<1x128x1xf32>
    %15 = vector.broadcast %14 : vector<1x128x1xf32> to vector<1x128x256xf32>
    %16 = arith.mulf %13, %15 : vector<1x128x256xf32>
    %c0_13 = arith.constant 0 : index
    %c0_14 = arith.constant 0 : index
    %c0_15 = arith.constant 0 : index
    %17 = vector.load %arg4[%c0_13, %c0_14, %c0_15] : memref<1x128x256xf32, #tpu.memory_space<vmem>>, vector<1x128x256xf32>
    tpu.vector_store %arg4[%c0_13, %c0_14, %c0_15], %16 {strides = array<i32>} : memref<1x128x256xf32, #tpu.memory_space<vmem>>, vector<1x128x256xf32>,
    return
  }
  func.func @transform_0(%arg0: i32) -> (i32, i32, i32) {
    %c0_i32 = arith.constant 0 : i32
    %c0_i32_0 = arith.constant 0 : i32
    %c0_i32_1 = arith.constant 0 : i32
    return %arg0, %c0_i32, %c0_i32_0 : i32, i32, i32
  }
  func.func @transform_1(%arg0: i32) -> (i32, i32) {
    %c0_i32 = arith.constant 0 : i32
    %c0_i32_0 = arith.constant 0 : i32
    %c0_i32_1 = arith.constant 0 : i32
    return %c0_i32, %c0_i32_0 : i32, i32
  }
  func.func @transform_2(%arg0: i32) -> (i32, i32) {
    %c0_i32 = arith.constant 0 : i32
    %c0_i32_0 = arith.constant 0 : i32
    %c0_i32_1 = arith.constant 0 : i32
    return %c0_i32, %c0_i32_0 : i32, i32
  }
  func.func @transform_3(%arg0: i32) -> (i32, i32, i32) {
    %c0_i32 = arith.constant 0 : i32
    %c0_i32_0 = arith.constant 0 : i32
    %c0_i32_1 = arith.constant 0 : i32
    return %arg0, %c0_i32, %c0_i32_0 : i32, i32, i32
  }
}

</mosaic_0001>

<llo_original>
// kernel: se_attention.1
$region0: #{se_attention.1}
  #allocation0 [shape = 'u32[]', space=smem, size = 0x4, offset = 0x4, fixed_abs, tag = 'smem constant byte address 0x4 - core index']
  #allocation1 [shape = 'u32[144,128]{1,0:T(1,128)}', space=vmem, size = 0x12000, scoped, tag = 'internal scratch']
  %s0 = inlined_call_operand.vmem [shape: f32[2,128,256], index: 0, kind: input, shape index: {}]
  %s1 = inlined_call_operand.vmem [shape: f32[128,8], index: 1, kind: input, shape index: {}]
  %s2 = inlined_call_operand.vmem [shape: f32[8,128], index: 2, kind: input, shape index: {}]
  %s3 = inlined_call_operand.vmem [shape: f32[2,128,256], index: 3, kind: output, shape index: {}]
  %s4 = sld [smem:[#allocation0]]
  $region45: #{se_attention.1} parent=0
    _
  %s6 = ssub.s32 1, %s4
  %s7 = scalar_select 0, %s6, %s4
  loop: start=0, step=1, limit=4
  $region2: #{se_attention.1} parent=0 // loop_pre_header
    _
  $region3: #{se_attention.1} parent=0 // loop_header
    %s9 = sphi 0, %s13
    %p10 = scmp.ge.s32.totalorder %s9, 4
    %s19 = sphi 0, %s21
    %s22 = sphi 0, %s19
    %s23 = sphi 0, %s22
    %s39 = sphi 0, %s23
    %s43 = sphi 0, %s43
    %s45 = sphi 0, %s43
    %s46 = sphi 0, %s45
    %s60 = sphi 0, %s46
    %s64 = sphi 0, %s64
    %s66 = sphi 0, %s64
    %s67 = sphi 0, %s66
    %s81 = sphi 0, %s67
    %s87 = sphi 0, %s89
    %s90 = sphi 0, %s87
    %s91 = sphi 0, %s90
    %s107 = sphi 0, %s91
  $region4: #{se_attention.1} parent=0 // loop_header_branch
    %12 = sbr.rel (%p10) target = $region8
  $region5: #{se_attention.1} parent=0 // loop_body
    %s14 = ssub.s32 %s9, 1
    %s15 = ssub.s32 %s9, 2
    %s16 = sadd.s32 %s9, 1
    %s17 = ssub.s32 %s9, %s16
    %p18 = scmp.eq.s32.totalorder %s17, 0
    %s20 = sadd.s32 %s19, 1
    %s21 = scalar_select %p18, %s19, %s20
    %p24 = pneg %p18
    %p25 = scmp.eq.s32.totalorder %s9, 1
    %p26 = por %p24, %p25
    %p27 = scmp.ne.s32.totalorder %s19, %s22
    %p28 = scmp.eq.s32.totalorder %s9, 0
    %p29 = por %p27, %p28
    %p30 = scmp.ne.s32.totalorder %s19, %s22
    %p31 = scmp.eq.s32.totalorder %s14, 1
    %p32 = por %p30, %p31
    %p33 = scmp.ne.s32.totalorder %s22, %s23
    %p34 = scmp.eq.s32.totalorder %s14, 0
    %p35 = por %p33, %p34
    %p36 = scmp.ne.s32.totalorder %s22, %s23
    %p37 = scmp.eq.s32.totalorder %s15, 1
    %p38 = por %p36, %p37
    %p40 = scmp.ne.s32.totalorder %s23, %s39
    %p41 = scmp.eq.s32.totalorder %s15, 0
    %p42 = por %p40, %p41
    %s44 = sadd.s32 %s43, 1
    %p47 = scmp.eq.s32.totalorder %s9, 1
    %p48 = scmp.ne.s32.totalorder %s43, %s45
    %p49 = scmp.eq.s32.totalorder %s9, 0
    %p50 = por %p48, %p49
    %p51 = scmp.ne.s32.totalorder %s43, %s45
    %p52 = scmp.eq.s32.totalorder %s14, 1
    %p53 = por %p51, %p52
    %p54 = scmp.ne.s32.totalorder %s45, %s46
    %p55 = scmp.eq.s32.totalorder %s14, 0
    %p56 = por %p54, %p55
    %p57 = scmp.ne.s32.totalorder %s45, %s46
    %p58 = scmp.eq.s32.totalorder %s15, 1
    %p59 = por %p57, %p58
    %p61 = scmp.ne.s32.totalorder %s46, %s60
    %p62 = scmp.eq.s32.totalorder %s15, 0
    %p63 = por %p61, %p62
    %s65 = sadd.s32 %s64, 1
    %p68 = scmp.eq.s32.totalorder %s9, 1
    %p69 = scmp.ne.s32.totalorder %s64, %s66
    %p70 = scmp.eq.s32.totalorder %s9, 0
    %p71 = por %p69, %p70
    %p72 = scmp.ne.s32.totalorder %s64, %s66
    %p73 = scmp.eq.s32.totalorder %s14, 1
    %p74 = por %p72, %p73
    %p75 = scmp.ne.s32.totalorder %s66, %s67
    %p76 = scmp.eq.s32.totalorder %s14, 0
    %p77 = por %p75, %p76
    %p78 = scmp.ne.s32.totalorder %s66, %s67
    %p79 = scmp.eq.s32.totalorder %s15, 1
    %p80 = por %p78, %p79
    %p82 = scmp.ne.s32.totalorder %s67, %s81
    %p83 = scmp.eq.s32.totalorder %s15, 0
    %p84 = por %p82, %p83
    %s85 = ssub.s32 %s9, %s16
    %p86 = scmp.eq.s32.totalorder %s85, 0
    %s88 = sadd.s32 %s87, 1
    %s89 = scalar_select %p86, %s87, %s88
    %p92 = pneg %p86
    %p93 = scmp.eq.s32.totalorder %s9, 1
    %p94 = por %p92, %p93
    %p95 = scmp.ne.s32.totalorder %s87, %s90
    %p96 = scmp.eq.s32.totalorder %s9, 0
    %p97 = por %p95, %p96
    %p98 = scmp.ne.s32.totalorder %s87, %s90
    %p99 = scmp.eq.s32.totalorder %s14, 1
    %p100 = por %p98, %p99
    %p101 = scmp.ne.s32.totalorder %s90, %s91
    %p102 = scmp.eq.s32.totalorder %s14, 0
    %p103 = por %p101, %p102
    %p104 = scmp.ne.s32.totalorder %s90, %s91
    %p105 = scmp.eq.s32.totalorder %s15, 1
    %p106 = por %p104, %p105
    %p108 = scmp.ne.s32.totalorder %s91, %s107
    %p109 = scmp.eq.s32.totalorder %s15, 0
    %p110 = por %p108, %p109
    %p111 = scmp.le.s32.totalorder 1, %s9
    %p112 = scmp.lt.s32.totalorder %s9, 3
    %p113 = pnand %p111, %p112
    %p114 = pneg %p113
    // Predicated region
    $region9: #{se_attention.1} parent=5 // pred_check
      _
    $region10: #{se_attention.1} parent=5 // pred_check_branch
      %116 = sbr.rel (%p113) target = $region12
    $region11: #{se_attention.1} parent=5 // pred_region
      %s117 = ssub.s32 %s9, 1
      // Predicated region
      $region13: #{se_attention.1} parent=11 // pred_check
        %p118 = pneg %p56
      $region14: #{se_attention.1} parent=11 // pred_check_branch
        %120 = sbr.rel (%p118) target = $region16
      $region15: #{se_attention.1} parent=11 // pred_region
        _
      $region16: #{se_attention.1} parent=11 // pred_fallthru
        _
      // Predicated region
      $region17: #{se_attention.1} parent=11 // pred_check
        %p121 = pneg %p77
      $region18: #{se_attention.1} parent=11 // pred_check_branch
        %123 = sbr.rel (%p121) target = $region20
      $region19: #{se_attention.1} parent=11 // pred_region
        _
      $region20: #{se_attention.1} parent=11 // pred_fallthru
        _
    $region12: #{se_attention.1} parent=5 // pred_fallthru
      _
    %p124 = scmp.lt.s32.totalorder %s9, 2
    // Predicated region
    $region21: #{se_attention.1} parent=5 // pred_check
      %p125 = pneg %p124
    $region22: #{se_attention.1} parent=5 // pred_check_branch
      %127 = sbr.rel (%p125) target = $region24
    $region23: #{se_attention.1} parent=5 // pred_region
      // Predicated region
      $region25: #{se_attention.1} parent=23 // pred_check
        %p128 = pneg %p29
      $region26: #{se_attention.1} parent=23 // pred_check_branch
        %130 = sbr.rel (%p128) target = $region28
      $region27: #{se_attention.1} parent=23 // pred_region
        %p131 = scmp.lt.s32.totalorder %s9, 1
        %s132 = scalar_select %p131, %s9, 1
        %s133 = smul.addr %s132, 32
        %s134 = smul.addr %s133, 8
        %s135 = scalar_lea.vmem %s0, %s134
      $region28: #{se_attention.1} parent=23 // pred_fallthru
        _
    $region24: #{se_attention.1} parent=5 // pred_fallthru
      _
    %p136 = scmp.le.s32.totalorder 1, %s9
    %p137 = scmp.lt.s32.totalorder %s9, 3
    %p138 = pnand %p136, %p137
    %p139 = pneg %p138
    // Predicated region
    $region29: #{se_attention.1} parent=5 // pred_check
      _
    $region30: #{se_attention.1} parent=5 // pred_check_branch
      %141 = sbr.rel (%p138) target = $region32
    $region31: #{se_attention.1} parent=5 // pred_region
      %s142 = ssub.s32 %s9, 1
      %p143 = scmp.lt.s32.totalorder %s14, 1
      %s144 = scalar_select %p143, %s14, 1
      %s145 = smul.addr %s144, 32
      %s146 = smul.addr %s145, 8
      %s147 = scalar_lea.vmem %s0, %s146
      %p148 = pneg %p35
      %p149 = pneg %p32
      %p150 = pneg %p56
      %p151 = pneg %p53
      %p152 = pneg %p77
      %p153 = pneg %p74
      %p154 = pneg %p103
      %p155 = pneg %p100
      %p156 = scmp.lt.s32.totalorder %s14, 1
      %s157 = scalar_select %p156, %s14, 1
      %s158 = smul.addr %s157, 32
      %s159 = smul.addr %s158, 8
      %s160 = scalar_lea.vmem %s3, %s159
      %p161 = scmp.lt.s32.totalorder %s14, 1
      %s162 = scalar_select %p161, %s14, 1
      %s163 = smul.addr %s162, 32
      %s164 = smul.addr %s163, 8
      %s165 = scalar_lea.vmem %s0, %s164
      %p166 = scmp.lt.s32.totalorder %s14, 1
      %s167 = scalar_select %p166, %s14, 1
      %s168 = smul.addr %s167, 32
      %s169 = smul.addr %s168, 8
      %s170 = scalar_lea.vmem %s3, %s169
      %v171 = vld [vmem:[%s165] sm:$0xff]
      %v172 = vld [vmem:[%s165 + $0x8] sm:$0xff]
      %v173 = vld [vmem:[%s165 + $0x10] sm:$0xff]
      %v174 = vld [vmem:[%s165 + $0x18] sm:$0xff]
      %v175 = vld [vmem:[%s165 + $0x20] sm:$0xff]
      %v176 = vld [vmem:[%s165 + $0x28] sm:$0xff]
      %v177 = vld [vmem:[%s165 + $0x30] sm:$0xff]
      %v178 = vld [vmem:[%s165 + $0x38] sm:$0xff]
      %v179 = vld [vmem:[%s165 + $0x40] sm:$0xff]
      %v180 = vld [vmem:[%s165 + $0x48] sm:$0xff]
      %v181 = vld [vmem:[%s165 + $0x50] sm:$0xff]
      %v182 = vld [vmem:[%s165 + $0x58] sm:$0xff]
      %v183 = vld [vmem:[%s165 + $0x60] sm:$0xff]
      %v184 = vld [vmem:[%s165 + $0x68] sm:$0xff]
      %v185 = vld [vmem:[%s165 + $0x70] sm:$0xff]
      %v186 = vld [vmem:[%s165 + $0x78] sm:$0xff]
      %v187 = vld [vmem:[%s165 + $0x80] sm:$0xff]
      %v188 = vld [vmem:[%s165 + $0x88] sm:$0xff]
      %v189 = vld [vmem:[%s165 + $0x90] sm:$0xff]
      %v190 = vld [vmem:[%s165 + $0x98] sm:$0xff]
      %v191 = vld [vmem:[%s165 + $0xa0] sm:$0xff]
      %v192 = vld [vmem:[%s165 + $0xa8] sm:$0xff]
      %v193 = vld [vmem:[%s165 + $0xb0] sm:$0xff]
      %v194 = vld [vmem:[%s165 + $0xb8] sm:$0xff]
      %v195 = vld [vmem:[%s165 + $0xc0] sm:$0xff]
      %v196 = vld [vmem:[%s165 + $0xc8] sm:$0xff]
      %v197 = vld [vmem:[%s165 + $0xd0] sm:$0xff]
      %v198 = vld [vmem:[%s165 + $0xd8] sm:$0xff]
      %v199 = vld [vmem:[%s165 + $0xe0] sm:$0xff]
      %v200 = vld [vmem:[%s165 + $0xe8] sm:$0xff]
      %v201 = vld [vmem:[%s165 + $0xf0] sm:$0xff]
      %v202 = vld [vmem:[%s165 + $0xf8] sm:$0xff]
      %v203 = vadd.f32 %v171, %v172
      %204 = vadd.xlane.f32.xlu0 %v203
      %v205 = vpop.xlane.xlu0 %204
      %v206 = vadd.f32 %v173, %v174
      %207 = vadd.xlane.f32.xlu0 %v206
      %v208 = vpop.xlane.xlu0 %207
      %v209 = vadd.f32 %v175, %v176
      %210 = vadd.xlane.f32.xlu0 %v209
      %v211 = vpop.xlane.xlu0 %210
      %v212 = vadd.f32 %v177, %v178
      %213 = vadd.xlane.f32.xlu0 %v212
      %v214 = vpop.xlane.xlu0 %213
      %v215 = vadd.f32 %v179, %v180
      %216 = vadd.xlane.f32.xlu0 %v215
      %v217 = vpop.xlane.xlu0 %216
      %v218 = vadd.f32 %v181, %v182
      %219 = vadd.xlane.f32.xlu0 %v218
      %v220 = vpop.xlane.xlu0 %219
      %v221 = vadd.f32 %v183, %v184
      %222 = vadd.xlane.f32.xlu0 %v221
      %v223 = vpop.xlane.xlu0 %222
      %v224 = vadd.f32 %v185, %v186
      %225 = vadd.xlane.f32.xlu0 %v224
      %v226 = vpop.xlane.xlu0 %225
      %v227 = vadd.f32 %v187, %v188
      %228 = vadd.xlane.f32.xlu0 %v227
      %v229 = vpop.xlane.xlu0 %228
      %v230 = vadd.f32 %v189, %v190
      %231 = vadd.xlane.f32.xlu0 %v230
      %v232 = vpop.xlane.xlu0 %231
      %v233 = vadd.f32 %v191, %v192
      %234 = vadd.xlane.f32.xlu0 %v233
      %v235 = vpop.xlane.xlu0 %234
      %v236 = vadd.f32 %v193, %v194
      %237 = vadd.xlane.f32.xlu0 %v236
      %v238 = vpop.xlane.xlu0 %237
      %v239 = vadd.f32 %v195, %v196
      %240 = vadd.xlane.f32.xlu0 %v239
      %v241 = vpop.xlane.xlu0 %240
      %v242 = vadd.f32 %v197, %v198
      %243 = vadd.xlane.f32.xlu0 %v242
      %v244 = vpop.xlane.xlu0 %243
      %v245 = vadd.f32 %v199, %v200
      %246 = vadd.xlane.f32.xlu0 %v245
      %v247 = vpop.xlane.xlu0 %246
      %v248 = vadd.f32 %v201, %v202
      %249 = vadd.xlane.f32.xlu0 %v248
      %v250 = vpop.xlane.xlu0 %249
      %v251 = vld [vmem:[%s1] sm:$0xff]
      %v252 = vld [vmem:[%s1 + $0x8] sm:$0xff]
      %v253 = vld [vmem:[%s1 + $0x10] sm:$0xff]
      %v254 = vld [vmem:[%s1 + $0x18] sm:$0xff]
      %v255 = vld [vmem:[%s1 + $0x20] sm:$0xff]
      %v256 = vld [vmem:[%s1 + $0x28] sm:$0xff]
      %v257 = vld [vmem:[%s1 + $0x30] sm:$0xff]
      %v258 = vld [vmem:[%s1 + $0x38] sm:$0xff]
      %v259 = vld [vmem:[%s1 + $0x40] sm:$0xff]
      %v260 = vld [vmem:[%s1 + $0x48] sm:$0xff]
      %v261 = vld [vmem:[%s1 + $0x50] sm:$0xff]
      %v262 = vld [vmem:[%s1 + $0x58] sm:$0xff]
      %v263 = vld [vmem:[%s1 + $0x60] sm:$0xff]
      %v264 = vld [vmem:[%s1 + $0x68] sm:$0xff]
      %v265 = vld [vmem:[%s1 + $0x70] sm:$0xff]
      %v266 = vld [vmem:[%s1 + $0x78] sm:$0xff]
      %v283 = vlaneseq
      %v284 = vand.u32 %v283, 127
      %v285 = vlaneseq
      %v286 = vshrl.u32 %v285, 7
      %v287 = vsub.s32 %v284, %v286
      %v288 = vrot.slane %v205, %v287
      %v289 = vadd.s32 %v284, 4294967288
      %v290 = vlaneseq
      %v291 = vshrl.u32 %v290, 7
      %v292 = vsub.s32 %v289, %v291
      %v293 = vrot.slane %v208, %v292
      %vm294 = vcmask 130112
      %v295 = vsel %vm294, %v293, %v288
      %v296 = vadd.s32 %v284, 4294967280
      %v297 = vlaneseq
      %v298 = vshrl.u32 %v297, 7
      %v299 = vsub.s32 %v296, %v298
      %v300 = vrot.slane %v211, %v299
      %vm301 = vcmask 195712
      %v302 = vsel %vm301, %v300, %v295
      %v303 = vadd.s32 %v284, 4294967272
      %v304 = vlaneseq
      %v305 = vshrl.u32 %v304, 7
      %v306 = vsub.s32 %v303, %v305
      %v307 = vrot.slane %v214, %v306
      %vm308 = vcmask 261312
      %v309 = vsel %vm308, %v307, %v302
      %v310 = vadd.s32 %v284, 4294967264
      %v311 = vlaneseq
      %v312 = vshrl.u32 %v311, 7
      %v313 = vsub.s32 %v310, %v312
      %v314 = vrot.slane %v217, %v313
      %vm315 = vcmask 326912
      %v316 = vsel %vm315, %v314, %v309
      %v317 = vadd.s32 %v284, 4294967256
      %v318 = vlaneseq
      %v319 = vshrl.u32 %v318, 7
      %v320 = vsub.s32 %v317, %v319
      %v321 = vrot.slane %v220, %v320
      %vm322 = vcmask 392512
      %v323 = vsel %vm322, %v321, %v316
      %v324 = vadd.s32 %v284, 4294967248
      %v325 = vlaneseq
      %v326 = vshrl.u32 %v325, 7
      %v327 = vsub.s32 %v324, %v326
      %v328 = vrot.slane %v223, %v327
      %vm329 = vcmask 458112
      %v330 = vsel %vm329, %v328, %v323
      %v331 = vadd.s32 %v284, 4294967240
      %v332 = vlaneseq
      %v333 = vshrl.u32 %v332, 7
      %v334 = vsub.s32 %v331, %v333
      %v335 = vrot.slane %v226, %v334
      %vm336 = vcmask 523712
      %v337 = vsel %vm336, %v335, %v330
      %v338 = vadd.s32 %v284, 4294967232
      %v339 = vlaneseq
      %v340 = vshrl.u32 %v339, 7
      %v341 = vsub.s32 %v338, %v340
      %v342 = vrot.slane %v229, %v341
      %vm343 = vcmask 589312
      %v344 = vsel %vm343, %v342, %v337
      %v345 = vadd.s32 %v284, 4294967224
      %v346 = vlaneseq
      %v347 = vshrl.u32 %v346, 7
      %v348 = vsub.s32 %v345, %v347
      %v349 = vrot.slane %v232, %v348
      %vm350 = vcmask 654912
      %v351 = vsel %vm350, %v349, %v344
      %v352 = vadd.s32 %v284, 4294967216
      %v353 = vlaneseq
      %v354 = vshrl.u32 %v353, 7
      %v355 = vsub.s32 %v352, %v354
      %v356 = vrot.slane %v235, %v355
      %vm357 = vcmask 720512
      %v358 = vsel %vm357, %v356, %v351
      %v359 = vadd.s32 %v284, 4294967208
      %v360 = vlaneseq
      %v361 = vshrl.u32 %v360, 7
      %v362 = vsub.s32 %v359, %v361
      %v363 = vrot.slane %v238, %v362
      %vm364 = vcmask 786112
      %v365 = vsel %vm364, %v363, %v358
      %v366 = vadd.s32 %v284, 4294967200
      %v367 = vlaneseq
      %v368 = vshrl.u32 %v367, 7
      %v369 = vsub.s32 %v366, %v368
      %v370 = vrot.slane %v241, %v369
      %vm371 = vcmask 851712
      %v372 = vsel %vm371, %v370, %v365
      %v373 = vadd.s32 %v284, 4294967192
      %v374 = vlaneseq
      %v375 = vshrl.u32 %v374, 7
      %v376 = vsub.s32 %v373, %v375
      %v377 = vrot.slane %v244, %v376
      %vm378 = vcmask 917312
      %v379 = vsel %vm378, %v377, %v372
      %v380 = vadd.s32 %v284, 4294967184
      %v381 = vlaneseq
      %v382 = vshrl.u32 %v381, 7
      %v383 = vsub.s32 %v380, %v382
      %v384 = vrot.slane %v247, %v383
      %vm385 = vcmask 982912
      %v386 = vsel %vm385, %v384, %v379
      %v387 = vadd.s32 %v284, 4294967176
      %v388 = vlaneseq
      %v389 = vshrl.u32 %v388, 7
      %v390 = vsub.s32 %v387, %v389
      %v391 = vrot.slane %v250, %v390
      %vm392 = vcmask 1048512
      %v393 = vsel %vm392, %v391, %v386
      %395 = vmatprep.subr.mxu0 0.0
      %396 = vmatpush1.msra.mxu0 %v251
      %397 = vmatprep.subr.mxu0 0.0
      %398 = vmatpush1.msra.mxu0 %v252
      %399 = vmatprep.subr.mxu0 0.0
      %400 = vmatpush1.msra.mxu0 %v253
      %401 = vmatprep.subr.mxu0 0.0
      %402 = vmatpush1.msra.mxu0 %v254
      %403 = vmatprep.subr.mxu0 0.0
      %404 = vmatpush1.msra.mxu0 %v255
      %405 = vmatprep.subr.mxu0 0.0
      %406 = vmatpush1.msra.mxu0 %v256
      %407 = vmatprep.subr.mxu0 0.0
      %408 = vmatpush1.msra.mxu0 %v257
      %409 = vmatprep.subr.mxu0 0.0
      %410 = vmatpush1.msra.mxu0 %v258
      %411 = vmatprep.subr.mxu0 0.0
      %412 = vmatpush1.msra.mxu0 %v259
      %413 = vmatprep.subr.mxu0 0.0
      %414 = vmatpush1.msra.mxu0 %v260
      %415 = vmatprep.subr.mxu0 0.0
      %416 = vmatpush1.msra.mxu0 %v261
      %417 = vmatprep.subr.mxu0 0.0
      %418 = vmatpush1.msra.mxu0 %v262
      %419 = vmatprep.subr.mxu0 0.0
      %420 = vmatpush1.msra.mxu0 %v263
      %421 = vmatprep.subr.mxu0 0.0
      %422 = vmatpush1.msra.mxu0 %v264
      %423 = vmatprep.subr.mxu0 0.0
      %424 = vmatpush1.msra.mxu0 %v265
      %425 = vmatprep.subr.mxu0 0.0
      %426 = vmatpush1.msra.mxu0 %v266
      %427 = vmatprep.subr.mxu0 0.0
      %428 = vmatpush1.msra.mxu0 0.0
      %429 = vmatprep.subr.mxu0 0.0
      %430 = vmatpush1.msra.mxu0 0.0
      %431 = vmatprep.subr.mxu0 0.0
      %432 = vmatpush1.msra.mxu0 0.0
      %433 = vmatprep.subr.mxu0 0.0
      %434 = vmatpush1.msra.mxu0 0.0
      %435 = vmatprep.subr.mxu0 0.0
      %436 = vmatpush1.msra.mxu0 0.0
      %437 = vmatprep.subr.mxu0 0.0
      %438 = vmatpush1.msra.mxu0 0.0
      %439 = vmatprep.subr.mxu0 0.0
      %440 = vmatpush1.msra.mxu0 0.0
      %441 = vmatprep.subr.mxu0 0.0
      %442 = vmatpush1.msra.mxu0 0.0
      %443 = vmatprep.subr.mxu0 0.0
      %444 = vmatpush1.msra.mxu0 0.0
      %445 = vmatprep.subr.mxu0 0.0
      %446 = vmatpush1.msra.mxu0 0.0
      %447 = vmatprep.subr.mxu0 0.0
      %448 = vmatpush1.msra.mxu0 0.0
      %449 = vmatprep.subr.mxu0 0.0
      %450 = vmatpush1.msra.mxu0 0.0
      %451 = vmatprep.subr.mxu0 0.0
      %452 = vmatpush1.msra.mxu0 0.0
      %453 = vmatprep.subr.mxu0 0.0
      %454 = vmatpush1.msra.mxu0 0.0
      %455 = vmatprep.subr.mxu0 0.0
      %456 = vmatpush1.msra.mxu0 0.0
      %457 = vmatprep.subr.mxu0 0.0
      %458 = vmatpush1.msra.mxu0 0.0
      %459 = vmatprep.mubr.f32.mxu0 0.0
      %460 = vmatmul.mubr.f32.gmra.mrb[0].mxu0 %v393
      %v461 = vpop.f32.mrb[0].mxu0
      %v462 = vadd.f32 0.0, %v461
      %v463 = vpop.f32.mrb[0].mxu0
      %464 = vdwg.mxu0
      %v465 = vmax.f32 %v462, 0.0
      %v466 = vld [vmem:[%s2] sm:$0xff]
      %vm467 = vcmask 64512
      %v469 = vsel %vm467, %v465, 0
      %471 = vmatprep.subr.mxu0 0.0
      %472 = vmatpush1.msra.mxu0 %v466
      %473 = vmatprep.subr.mxu0 0.0
      %474 = vmatpush1.msra.mxu0 0.0
      %475 = vmatprep.subr.mxu0 0.0
      %476 = vmatpush1.msra.mxu0 0.0
      %477 = vmatprep.subr.mxu0 0.0
      %478 = vmatpush1.msra.mxu0 0.0
      %479 = vmatprep.subr.mxu0 0.0
      %480 = vmatpush1.msra.mxu0 0.0
      %481 = vmatprep.subr.mxu0 0.0
      %482 = vmatpush1.msra.mxu0 0.0
      %483 = vmatprep.subr.mxu0 0.0
      %484 = vmatpush1.msra.mxu0 0.0
      %485 = vmatprep.subr.mxu0 0.0
      %486 = vmatpush1.msra.mxu0 0.0
      %487 = vmatprep.subr.mxu0 0.0
      %488 = vmatpush1.msra.mxu0 0.0
      %489 = vmatprep.subr.mxu0 0.0
      %490 = vmatpush1.msra.mxu0 0.0
      %491 = vmatprep.subr.mxu0 0.0
      %492 = vmatpush1.msra.mxu0 0.0
      %493 = vmatprep.subr.mxu0 0.0
      %494 = vmatpush1.msra.mxu0 0.0
      %495 = vmatprep.subr.mxu0 0.0
      %496 = vmatpush1.msra.mxu0 0.0
      %497 = vmatprep.subr.mxu0 0.0
      %498 = vmatpush1.msra.mxu0 0.0
      %499 = vmatprep.subr.mxu0 0.0
      %500 = vmatpush1.msra.mxu0 0.0
      %501 = vmatprep.subr.mxu0 0.0
      %502 = vmatpush1.msra.mxu0 0.0
      %503 = vmatprep.subr.mxu0 0.0
      %504 = vmatpush1.msra.mxu0 0.0
      %505 = vmatprep.subr.mxu0 0.0
      %506 = vmatpush1.msra.mxu0 0.0
      %507 = vmatprep.subr.mxu0 0.0
      %508 = vmatpush1.msra.mxu0 0.0
      %509 = vmatprep.subr.mxu0 0.0
      %510 = vmatpush1.msra.mxu0 0.0
      %511 = vmatprep.subr.mxu0 0.0
      %512 = vmatpush1.msra.mxu0 0.0
      %513 = vmatprep.subr.mxu0 0.0
      %514 = vmatpush1.msra.mxu0 0.0
      %515 = vmatprep.subr.mxu0 0.0
      %516 = vmatpush1.msra.mxu0 0.0
      %517 = vmatprep.subr.mxu0 0.0
      %518 = vmatpush1.msra.mxu0 0.0
      %519 = vmatprep.subr.mxu0 0.0
      %520 = vmatpush1.msra.mxu0 0.0
      %521 = vmatprep.subr.mxu0 0.0
      %522 = vmatpush1.msra.mxu0 0.0
      %523 = vmatprep.subr.mxu0 0.0
      %524 = vmatpush1.msra.mxu0 0.0
      %525 = vmatprep.subr.mxu0 0.0
      %526 = vmatpush1.msra.mxu0 0.0
      %527 = vmatprep.subr.mxu0 0.0
      %528 = vmatpush1.msra.mxu0 0.0
      %529 = vmatprep.subr.mxu0 0.0
      %530 = vmatpush1.msra.mxu0 0.0
      %531 = vmatprep.subr.mxu0 0.0
      %532 = vmatpush1.msra.mxu0 0.0
      %533 = vmatprep.subr.mxu0 0.0
      %534 = vmatpush1.msra.mxu0 0.0
      %535 = vmatprep.mubr.f32.mxu0 0.0
      %536 = vmatmul.mubr.f32.gmra.mrb[0].mxu0 %v469
      %v537 = vpop.f32.mrb[0].mxu0
      %v538 = vadd.f32 0.0, %v537
      %v539 = vpop.f32.mrb[0].mxu0
      %540 = vdwg.mxu0
      %v541 = vxor.u32 %v538, 2147483648
      %v542 = vmul.f32 %v541, 1.442695
      %v543 = vpow.pop %v542
      %v544 = vadd.f32 %v543, 1.0
      %v545 = vrcp.pop %v544
      %v546 = vmul.f32 1.0, %v545
      %v547 = vlaneseq
      %v548 = vshrl.u32 %v547, 7
      %v549 = vsub.s32 0, %v548
      %v550 = vrot.slane %v546, %v549
      %552 = vbcast.lane.b32.xlu0 %v550, 256
      %v553 = vpop.permute.xlu0 %552
      %s555 = sor.u32 256, 8
      %556 = vbcast.lane.b32.xlu0 %v550, %s555
      %v557 = vpop.permute.xlu0 %556
      %s559 = sor.u32 256, 16
      %560 = vbcast.lane.b32.xlu0 %v550, %s559
      %v561 = vpop.permute.xlu0 %560
      %s563 = sor.u32 256, 24
      %564 = vbcast.lane.b32.xlu0 %v550, %s563
      %v565 = vpop.permute.xlu0 %564
      %s567 = sor.u32 256, 32
      %568 = vbcast.lane.b32.xlu0 %v550, %s567
      %v569 = vpop.permute.xlu0 %568
      %s571 = sor.u32 256, 40
      %572 = vbcast.lane.b32.xlu0 %v550, %s571
      %v573 = vpop.permute.xlu0 %572
      %s575 = sor.u32 256, 48
      %576 = vbcast.lane.b32.xlu0 %v550, %s575
      %v577 = vpop.permute.xlu0 %576
      %s579 = sor.u32 256, 56
      %580 = vbcast.lane.b32.xlu0 %v550, %s579
      %v581 = vpop.permute.xlu0 %580
      %s583 = sor.u32 256, 64
      %584 = vbcast.lane.b32.xlu0 %v550, %s583
      %v585 = vpop.permute.xlu0 %584
      %s587 = sor.u32 256, 72
      %588 = vbcast.lane.b32.xlu0 %v550, %s587
      %v589 = vpop.permute.xlu0 %588
      %s591 = sor.u32 256, 80
      %592 = vbcast.lane.b32.xlu0 %v550, %s591
      %v593 = vpop.permute.xlu0 %592
      %s595 = sor.u32 256, 88
      %596 = vbcast.lane.b32.xlu0 %v550, %s595
      %v597 = vpop.permute.xlu0 %596
      %s599 = sor.u32 256, 96
      %600 = vbcast.lane.b32.xlu0 %v550, %s599
      %v601 = vpop.permute.xlu0 %600
      %s603 = sor.u32 256, 104
      %604 = vbcast.lane.b32.xlu0 %v550, %s603
      %v605 = vpop.permute.xlu0 %604
      %s607 = sor.u32 256, 112
      %608 = vbcast.lane.b32.xlu0 %v550, %s607
      %v609 = vpop.permute.xlu0 %608
      %s611 = sor.u32 256, 120
      %612 = vbcast.lane.b32.xlu0 %v550, %s611
      %v613 = vpop.permute.xlu0 %612
      %v614 = vmul.f32 %v171, %v553
      %v615 = vmul.f32 %v172, %v553
      %v616 = vmul.f32 %v173, %v557
      %v617 = vmul.f32 %v174, %v557
      %v618 = vmul.f32 %v175, %v561
      %v619 = vmul.f32 %v176, %v561
      %v620 = vmul.f32 %v177, %v565
      %v621 = vmul.f32 %v178, %v565
      %v622 = vmul.f32 %v179, %v569
      %v623 = vmul.f32 %v180, %v569
      %v624 = vmul.f32 %v181, %v573
      %v625 = vmul.f32 %v182, %v573
      %v626 = vmul.f32 %v183, %v577
      %v627 = vmul.f32 %v184, %v577
      %v628 = vmul.f32 %v185, %v581
      %v629 = vmul.f32 %v186, %v581
      %v630 = vmul.f32 %v187, %v585
      %v631 = vmul.f32 %v188, %v585
      %v632 = vmul.f32 %v189, %v589
      %v633 = vmul.f32 %v190, %v589
      %v634 = vmul.f32 %v191, %v593
      %v635 = vmul.f32 %v192, %v593
      %v636 = vmul.f32 %v193, %v597
      %v637 = vmul.f32 %v194, %v597
      %v638 = vmul.f32 %v195, %v601
      %v639 = vmul.f32 %v196, %v601
      %v640 = vmul.f32 %v197, %v605
      %v641 = vmul.f32 %v198, %v605
      %v642 = vmul.f32 %v199, %v609
      %v643 = vmul.f32 %v200, %v609
      %v644 = vmul.f32 %v201, %v613
      %v645 = vmul.f32 %v202, %v613
      %646 = vst [vmem:[%s170] sm:$0xff] %v614
      %647 = vst [vmem:[%s170 + $0x8] sm:$0xff] %v615
      %648 = vst [vmem:[%s170 + $0x10] sm:$0xff] %v616
      %649 = vst [vmem:[%s170 + $0x18] sm:$0xff] %v617
      %650 = vst [vmem:[%s170 + $0x20] sm:$0xff] %v618
      %651 = vst [vmem:[%s170 + $0x28] sm:$0xff] %v619
      %652 = vst [vmem:[%s170 + $0x30] sm:$0xff] %v620
      %653 = vst [vmem:[%s170 + $0x38] sm:$0xff] %v621
      %654 = vst [vmem:[%s170 + $0x40] sm:$0xff] %v622
      %655 = vst [vmem:[%s170 + $0x48] sm:$0xff] %v623
      %656 = vst [vmem:[%s170 + $0x50] sm:$0xff] %v624
      %657 = vst [vmem:[%s170 + $0x58] sm:$0xff] %v625
      %658 = vst [vmem:[%s170 + $0x60] sm:$0xff] %v626
      %659 = vst [vmem:[%s170 + $0x68] sm:$0xff] %v627
      %660 = vst [vmem:[%s170 + $0x70] sm:$0xff] %v628
      %661 = vst [vmem:[%s170 + $0x78] sm:$0xff] %v629
      %662 = vst [vmem:[%s170 + $0x80] sm:$0xff] %v630
      %663 = vst [vmem:[%s170 + $0x88] sm:$0xff] %v631
      %664 = vst [vmem:[%s170 + $0x90] sm:$0xff] %v632
      %665 = vst [vmem:[%s170 + $0x98] sm:$0xff] %v633
      %666 = vst [vmem:[%s170 + $0xa0] sm:$0xff] %v634
      %667 = vst [vmem:[%s170 + $0xa8] sm:$0xff] %v635
      %668 = vst [vmem:[%s170 + $0xb0] sm:$0xff] %v636
      %669 = vst [vmem:[%s170 + $0xb8] sm:$0xff] %v637
      %670 = vst [vmem:[%s170 + $0xc0] sm:$0xff] %v638
      %671 = vst [vmem:[%s170 + $0xc8] sm:$0xff] %v639
      %672 = vst [vmem:[%s170 + $0xd0] sm:$0xff] %v640
      %673 = vst [vmem:[%s170 + $0xd8] sm:$0xff] %v641
      %674 = vst [vmem:[%s170 + $0xe0] sm:$0xff] %v642
      %675 = vst [vmem:[%s170 + $0xe8] sm:$0xff] %v643
      %676 = vst [vmem:[%s170 + $0xf0] sm:$0xff] %v644
      %677 = vst [vmem:[%s170 + $0xf8] sm:$0xff] %v645
      %p678 = scmp.lt.s32.totalorder %s14, 1
      %s679 = scalar_select %p678, %s14, 1
      %s680 = smul.addr %s679, 32
      %s681 = smul.addr %s680, 8
      %s682 = scalar_lea.vmem %s3, %s681
      // Predicated region
      $region33: #{se_attention.1} parent=31 // pred_check
        %p683 = pneg %p100
      $region34: #{se_attention.1} parent=31 // pred_check_branch
        %685 = sbr.rel (%p683) target = $region36
      $region35: #{se_attention.1} parent=31 // pred_region
        _
      $region36: #{se_attention.1} parent=31 // pred_fallthru
        _
    $region32: #{se_attention.1} parent=5 // pred_fallthru
      _
    %p686 = scmp.le.s32.totalorder 2, %s9
    // Predicated region
    $region37: #{se_attention.1} parent=5 // pred_check
      %p687 = pneg %p686
    $region38: #{se_attention.1} parent=5 // pred_check_branch
      %689 = sbr.rel (%p687) target = $region40
    $region39: #{se_attention.1} parent=5 // pred_region
      %s690 = ssub.s32 %s9, 2
      // Predicated region
      $region41: #{se_attention.1} parent=39 // pred_check
        %p691 = pneg %p106
      $region42: #{se_attention.1} parent=39 // pred_check_branch
        %693 = sbr.rel (%p691) target = $region44
      $region43: #{se_attention.1} parent=39 // pred_region
        %p694 = scmp.lt.s32.totalorder %s15, 1
        %s695 = scalar_select %p694, %s15, 1
        %s696 = smul.addr %s695, 32
        %s697 = smul.addr %s696, 8
        %s698 = scalar_lea.vmem %s3, %s697
      $region44: #{se_attention.1} parent=39 // pred_fallthru
        _
    $region40: #{se_attention.1} parent=5 // pred_fallthru
      _
  $region6: #{se_attention.1} parent=0 // loop_footer
    %s13 = sadd.s32 1, %s9
  $region7: #{se_attention.1} parent=0 // loop_footer_branch
    %8 = sbr.rel target = $region3
  $region8: #{se_attention.1} parent=0 // loop_exit
    _

</llo_original>
